<compile_context>
chip_gen: v7x
topology: tpu7x:2x2x1
jax: 0.10.0
libtpu: 0.0.40
codegen_flags: <defaults>
</compile_context>

<pallas_src>
import jax
import jax.numpy as jnp
from jax.experimental import pallas as pl
from jax.experimental.pallas import tpu as pltpu

# ----------------------------------------------------------------------------
# synthetic "config" constants (the original reads these from a config module)
# ----------------------------------------------------------------------------
MIX_LOSS_WEIGHT_3D_VDC_LM = 0.5
MIX_LOSS_WEIGHT_FR_CENTER_LOSS = 0.008
MIX_LOSS_WEIGHT_FR = 1.0
LOSS_WEIGHT_TIK_EXP = 0.1

# model sizes (synthetic but shape-consistent with the PyTorch module)
B = 8            # batch
N_ID = 16        # number of FR identity classes (fr_ip output dim)
D_SHP = 99       # shape params / fr embedding dim
D_EXP = 29       # expression params
K_BFM = D_SHP + D_EXP          # = 128: fused contraction dim (one MXU pass)
N_LM = 68        # landmarks (synthetic BFM keeps only the 68 landmark verts,
                 # so get_landmark_68 is the identity on face_proj)
D_COORD = 128    # lane-aligned per-coordinate block (68 real + 60 zero pad)
D_FACE_PAD = 3 * D_COORD       # = 384: [x|pad|y|pad|z|pad]
D_RHS = 4 * D_COORD            # = 512: [x|pad|y|pad|z|pad|logits|pad]
N_OUT = 8        # reduced output columns
N_SCAL = 22      # packed per-sample scalars: cam(7)|gtP(12)|ind_id|ind_3d|gt_id


# ----------------------------------------------------------------------------
# Pallas kernel
# ----------------------------------------------------------------------------
def _mixed_loss_kernel(lhs_ref, scal_ref, ctr_ref, wbfm_ref, mu_ref, out_ref):
    f32 = jnp.float32
    lhs = lhs_ref[...]                    # [2B, 128] f32: rows 0:B pred params,
                                          #                rows B:2B gt params
    scal = scal_ref[...]                  # [B, 22]   packed per-sample scalars
    ctr = ctr_ref[...]                    # [B, 128]  center[gt_id] lane-padded

    nb = scal.shape[0]
    pred = lhs[0:nb, :]                   # [B, 128] = [shp(99) | exp(29)]

    # lane masks over the fused parameter vector (full-vreg VPU ops, no shuffles)
    lane_p = jax.lax.broadcasted_iota(jnp.int32, (nb, K_BFM), 1)
    mask_shp = (lane_p < D_SHP).astype(f32)
    mask_exp = (lane_p >= D_SHP).astype(f32)

    # per-sample scalar unpack (all within the first lane tile)
    q = scal[:, 0:4]
    tx = scal[:, 4:5]; ty = scal[:, 5:6]; tz = scal[:, 6:7]
    g00 = scal[:, 7:8];   g01 = scal[:, 8:9];   g02 = scal[:, 9:10];  ox = scal[:, 10:11]
    g10 = scal[:, 11:12]; g11 = scal[:, 12:13]; g12 = scal[:, 13:14]; oy = scal[:, 14:15]
    g20 = scal[:, 15:16]; g21 = scal[:, 16:17]; g22 = scal[:, 17:18]; oz = scal[:, 18:19]
    ind_id = scal[:, 19:20]; ind_3d = scal[:, 20:21]
    gt_id = scal[:, 21:22].astype(jnp.int32)                        # [B, 1] int

    # -------- ONE fused MXU pass: BFM faces (pred + gt) AND FR logits.
    # bf16 operands / f32 accumulation (precision tradeoff accepted; loss-level
    # drift only).  Cols 0:384 = [x|y|z] face basis, cols 384:400 = FR weight,
    # rest zero; mu_ref carries the FR bias in the same lanes.
    face = mu_ref[...] + jnp.dot(lhs.astype(jnp.bfloat16), wbfm_ref[...],
                                 preferred_element_type=f32)        # [2B, 512]

    # -------- FR branch: logits live in the 4th lane block of the pred rows
    logits = face[0:nb, D_FACE_PAD:D_RHS]                           # [B, 128]
    lane_c = jax.lax.broadcasted_iota(jnp.int32, (nb, D_COORD), 1)
    valid_id = lane_c < N_ID
    lm = jnp.where(valid_id, logits, jnp.full_like(logits, -1e30))
    m = jnp.max(lm, axis=-1, keepdims=True)
    lse = m + jnp.log(jnp.sum(jnp.exp(lm - m), axis=-1, keepdims=True))
    onehot = (lane_c == gt_id).astype(f32)                          # [B, 128]
    tgt_logit = jnp.sum(logits * onehot, axis=-1, keepdims=True)    # same logits -> ce >= 0
    ce = lse - tgt_logit                                            # [B, 1]
    loss_fr_per = ind_id * ce

    # -------- get_weighted: quaternion -> R -> cos(euler), exp-norm damping
    qsq = jnp.sum(q * q, axis=-1, keepdims=True)
    qinv = jax.lax.rsqrt(qsq + 1e-12)                               # eps: no NaN on ~0 quat
    q0 = q[:, 0:1] * qinv; q1 = q[:, 1:2] * qinv
    q2 = q[:, 2:3] * qinv; q3 = q[:, 3:4] * qinv
    r00 = 1.0 - 2.0 * (q2 * q2 + q3 * q3); r01 = 2.0 * (q1 * q2 - q0 * q3)
    r02 = 2.0 * (q1 * q3 + q0 * q2)
    r10 = 2.0 * (q1 * q2 + q0 * q3); r11 = 1.0 - 2.0 * (q1 * q1 + q3 * q3)
    r12 = 2.0 * (q2 * q3 - q0 * q1)
    r20 = 2.0 * (q1 * q3 - q0 * q2); r21 = 2.0 * (q2 * q3 + q0 * q1)
    r22 = 1.0 - 2.0 * (q1 * q1 + q2 * q2)
    # cos of the principal-branch euler angles from matrix2angle:
    #   cos(asin(a)) = sqrt(1-a^2),  cos(atan2(b,a)) = a / sqrt(a^2+b^2)
    # TODO(synk): gimbal-lock branch (|R[2,0]| == 1) of matrix2angle is not
    # special-cased; denominators are eps-clamped so it degrades smoothly.
    eps = 1e-12
    cos_x = jnp.sqrt(jnp.maximum(1.0 - r20 * r20, 0.0))
    cos_y = r22 * jax.lax.rsqrt(r21 * r21 + r22 * r22 + eps)
    cos_z = r00 * jax.lax.rsqrt(r00 * r00 + r10 * r10 + eps)
    exp_sq = jnp.sum(mask_exp * pred * pred, axis=-1, keepdims=True)
    exp_norm = jnp.sqrt(exp_sq)
    inv_1pe = pl.reciprocal(1.0 + exp_norm, approx=True)            # EUP slot
    weights = (cos_x + cos_y + cos_z + inv_1pe) * 0.25               # [B,1]

    # -------- center loss (fr_loss_sup, synthetic): 0.5 * ||shp - center[id]||^2
    dc = pred - ctr                                                  # ctr zero past 99
    loss_center_per = ind_id * 0.5 * jnp.sum(mask_shp * dc * dc,
                                             axis=-1, keepdims=True)
    weighted_center_per = weights * loss_center_per

    # -------- 3D branch: pred / gt faces from the same fused matmul result
    fx = face[0:nb, 0:D_COORD]
    fy = face[0:nb, D_COORD:2 * D_COORD]
    fz = face[0:nb, 2 * D_COORD:3 * D_COORD]
    gx = face[nb:2 * nb, 0:D_COORD]
    gy = face[nb:2 * nb, D_COORD:2 * D_COORD]
    gz = face[nb:2 * nb, 2 * D_COORD:3 * D_COORD]

    # predicted projection: R(q) @ face + t   (pure row-broadcast elementwise)
    px = r00 * fx + r01 * fy + r02 * fz + tx
    py = r10 * fx + r11 * fy + r12 * fz + ty
    pz = r20 * fx + r21 * fy + r22 * fz + tz
    # gt projection: p (param[:, :12].view(3,4)[:, :3]) @ face + offset
    qx = g00 * gx + g01 * gy + g02 * gz + ox
    qy = g10 * gx + g11 * gy + g12 * gz + oy
    qz = g20 * gx + g21 * gy + g22 * gz + oz

    dx = qx - px; dy = qy - py; dz = qz - pz
    vdc = jnp.sqrt(dx * dx + dy * dy + dz * dz)                     # [B, 128]
    mask_lm = (lane_c < N_LM).astype(f32)                           # real landmarks only
    loss_3d_per = (MIX_LOSS_WEIGHT_3D_VDC_LM / N_LM) * jnp.sum(
        mask_lm * vdc, axis=-1, keepdims=True)                      # [B, 1]

    # -------- regularizers (batch-mean of squared norms)
    # TODO(synk): BFM sigma-weighted "batch distribution" shape regularizer is
    # replaced by an unweighted L2 batch mean (synthetic weights, same reduction).
    shp_sq = jnp.sum(mask_shp * pred * pred, axis=-1, keepdims=True)
    inv_b = 1.0 / nb

    # -------- fold ALL batch reductions into the kernel: one [1, 8] row
    cols = jnp.concatenate(
        [loss_fr_per,                # 0: sum(ind_id * ce)
         loss_center_per,            # 1: sum(center loss)
         weighted_center_per,        # 2: sum(weights * center loss)
         ind_3d * loss_3d_per,       # 3: sum(ind_3d * loss_3d)
         ind_id,                     # 4: sum(ind_id)
         ind_3d,                     # 5: sum(ind_3d)
         shp_sq * inv_b,             # 6: regular_loss_shape (batch mean)
         exp_sq * inv_b],            # 7: regular_loss_exp   (batch mean)
        axis=1)                                                     # [B, 8]
    out_ref[...] = jnp.sum(cols, axis=0, keepdims=True)             # [1, 8]


# ----------------------------------------------------------------------------
# wrapper
# ----------------------------------------------------------------------------
def _full_spec(shape):
    zeros = (0,) * len(shape)
    return pl.BlockSpec(shape, lambda i, _z=zeros: _z)


def _pad_face_lanes(a):
    """Coordinate-major [..., 204] -> lane-aligned [..., 384] = [x|0|y|0|z|0]."""
    pad = jnp.zeros(a.shape[:-1] + (D_COORD - N_LM,), a.dtype)
    return jnp.concatenate(
        [a[..., 0:N_LM], pad,
         a[..., N_LM:2 * N_LM], pad,
         a[..., 2 * N_LM:3 * N_LM], pad], axis=-1)


def init_params(key):
    ks = jax.random.split(key, 6)
    fr_w = 0.05 * jax.random.normal(ks[0], (D_SHP, N_ID), jnp.float32)
    fr_b = 0.01 * jax.random.normal(ks[1], (1, N_ID), jnp.float32)
    centers = 0.5 * jax.random.normal(ks[2], (N_ID, D_SHP), jnp.float32)
    mu = jax.random.normal(ks[3], (1, 3 * N_LM), jnp.float32)
    w_shp = 0.1 * jax.random.normal(ks[4], (D_SHP, 3 * N_LM), jnp.float32)
    w_exp = 0.1 * jax.random.normal(ks[5], (D_EXP, 3 * N_LM), jnp.float32)

    # ONE-TIME layout work: lane-pad the face axis, fuse shape+exp bases AND the
    # FR weight/bias into a single K=128, N=512 MXU operand (cols 384:400 = FR),
    # cast MXU operand to bf16 (f32 accumulation kept inside the kernel),
    # lane-pad the center rows so the per-call gather needs no padding.
    w_face = jnp.concatenate([_pad_face_lanes(w_shp), _pad_face_lanes(w_exp)],
                             axis=0)                                  # [128, 384]
    frw_block = jnp.zeros((K_BFM, D_COORD), jnp.float32)
    frw_block = frw_block.at[0:D_SHP, 0:N_ID].set(fr_w)               # exp rows stay 0
    w_bfm_ext = jnp.concatenate([w_face, frw_block],
                                axis=1).astype(jnp.bfloat16)          # [128, 512]

    frb_block = jnp.zeros((1, D_COORD), jnp.float32).at[:, 0:N_ID].set(fr_b)
    mu_ext = jnp.concatenate([_pad_face_lanes(mu), frb_block], axis=1)  # [1, 512]

    centers_pad = jnp.concatenate(
        [centers, jnp.zeros((N_ID, K_BFM - D_SHP), jnp.float32)], axis=1)  # [16, 128]

    return {
        "centers": centers,          # f32, returned (matches torch fr_loss_sup)
        "centers_pad": centers_pad,  # [N_ID, 128] f32, kernel gather source
        "w_bfm_ext": w_bfm_ext,      # [128, 512] bf16 fused MXU weight
        "mu_ext": mu_ext,            # [1, 512] f32 (mu | fr_b)
    }


def mixed_loss_fr_batch(params, feature_fr, pred_camera_exp, pred_shape, gt_label):
    # feature_fr is unused in the original forward (fr_embedding = pred_shape)
    del feature_fr
    f32 = jnp.float32
    batch = pred_camera_exp.shape[0]

    cam_exp = pred_camera_exp.astype(f32)
    shp = pred_shape[:, 0:D_SHP].astype(f32)
    gt3d = gt_label["3d"].astype(f32)
    gt_id = gt_label["id"].astype(jnp.int32)
    ind_id = gt_label["ind_id"].astype(f32).reshape(batch, 1)
    ind_3d = gt_label["ind_3d"].astype(f32).reshape(batch, 1)

    # --- per-call packing kept to 3 concats + 1 gather (zeros fold to constants
    # under jit; all weight-side work is one-time in init_params).
    # fused BFM LHS: rows 0:B = [shp | exp], rows B:2B = [gt_shp40 pad | gt_exp10 pad]
    lhs_pred = jnp.concatenate([shp, cam_exp[:, 7:36]], axis=1)       # [B, 128]
    lhs_gt = jnp.concatenate(
        [gt3d[:, 12:52], jnp.zeros((batch, D_SHP - 40), f32),
         gt3d[:, 52:62], jnp.zeros((batch, D_EXP - 10), f32)], axis=1)  # [B, 128]
    lhs = jnp.concatenate([lhs_pred, lhs_gt], axis=0)                 # [2B, 128]

    # packed per-sample scalars: cam(7) | gt_proj(12) | ind_id | ind_3d | gt_id
    scal = jnp.concatenate([cam_exp[:, 0:7], gt3d[:, 0:12],
                            ind_id, ind_3d,
                            gt_id.astype(f32).reshape(batch, 1)], axis=1)  # [B, 22]

    # gathered, pre-padded center rows (replaces the one-hot center matmul)
    ctr = jnp.take(params["centers_pad"], gt_id, axis=0)              # [B, 128]

    inputs = (lhs, scal, ctr, params["w_bfm_ext"], params["mu_ext"])

    out = pl.pallas_call(
        _mixed_loss_kernel,
        out_shape=jax.ShapeDtypeStruct((1, N_OUT), jnp.float32),
        grid=(1,),
        in_specs=[_full_spec(x.shape) for x in inputs],
        out_specs=_full_spec((1, N_OUT)),
        compiler_params=pltpu.CompilerParams(
            dimension_semantics=("arbitrary",)),
    )(*inputs)
    # TODO(synk): for production batch sizes, make batch a leading "parallel"
    # grid axis with a per-block [num_blocks, 8] output (summed in the wrapper)
    # so v7x's 2 TensorCores split the work; pointless at B=8.
    # TODO(synk): if the real BFM vertex count (~35-53k) replaces the synthetic
    # 68-landmark basis, tile the vertex axis as a grid dimension and raise
    # vmem_limit_bytes (w_bfm would be ~27-41 MiB bf16).

    row = out[0]
    s_fr, s_cen, s_wcen, s_3d = row[0], row[1], row[2], row[3]
    s_id, s_i3 = row[4], row[5]
    regular_loss_shape, regular_loss_exp = row[6], row[7]

    # branch selection (torch `if sum(ind) >= 1`) — safe divides, no NaN.
    has_id = s_id >= 1.0
    inv_id = jnp.where(has_id, 1.0 / jnp.maximum(s_id, 1.0), 0.0)
    loss_center = s_cen * inv_id
    weighted_center_loss = (s_wcen * inv_id
                            * MIX_LOSS_WEIGHT_FR_CENTER_LOSS * MIX_LOSS_WEIGHT_FR)
    loss_fr = s_fr * inv_id
    loss_fr_all = loss_center * MIX_LOSS_WEIGHT_FR_CENTER_LOSS + loss_fr

    has_3d = s_i3 >= 1.0
    inv_3d = jnp.where(has_3d, 1.0 / jnp.maximum(s_i3, 1.0), 0.0)
    loss_3d = s_3d * inv_3d

    # NOTE: matches the original — regular_loss_shape is returned but NOT added.
    loss = (loss_3d + MIX_LOSS_WEIGHT_FR * loss_fr_all
            + regular_loss_exp * LOSS_WEIGHT_TIK_EXP)

    return (loss, loss_fr, loss_3d / MIX_LOSS_WEIGHT_3D_VDC_LM, loss_center,
            regular_loss_shape, params["centers"], weighted_center_loss)


# ----------------------------------------------------------------------------
if __name__ == "__main__":
    key = jax.random.PRNGKey(0)
    k1, k2, k3, k4, k5 = jax.random.split(key, 5)

    feature_fr = jax.random.normal(k1, (B, 128), jnp.float32)       # unused by fwd
    pred_camera_exp = 0.5 * jax.random.normal(k2, (B, 36), jnp.float32)
    pred_shape = 0.5 * jax.random.normal(k3, (B, D_SHP), jnp.float32)
    gt_3d = 0.3 * jax.random.normal(k4, (B, 62), jnp.float32)
    gt_id = jax.random.randint(k5, (B,), 0, N_ID)
    gt_label = {
        "id": gt_id,
        "ind_id": jnp.array([1, 1, 0, 1, 1, 1, 0, 1], jnp.float32),
        "ind_3d": jnp.array([1, 0, 1, 1, 1, 0, 1, 1], jnp.float32),
        "3d": gt_3d,
    }

    params = init_params(jax.random.PRNGKey(42))

    fwd = jax.jit(mixed_loss_fr_batch)
    outs = fwd(params, feature_fr, pred_camera_exp, pred_shape, gt_label)
    jax.block_until_ready(outs)
    print("KERNEL_OK")
</pallas_src>

<mosaic_0001>
module attributes {stable_mosaic.version = 11 : i64} {
  func.func @_mixed_loss_kernel(%arg0: i32, %arg1: memref<16x128xf32, #tpu.memory_space<vmem>>, %arg2: memref<8x22xf32, #tpu.memory_space<vmem>>, %arg3: memref<8x128xf32, #tpu.memory_space<vmem>>, %arg4: memref<128x512xbf16, #tpu.memory_space<vmem>>, %arg5: memref<1x512xf32, #tpu.memory_space<vmem>>, %arg6: memref<1x8xf32, #tpu.memory_space<vmem>>) attributes {dimension_semantics = [#tpu.dimension_semantics<arbitrary>], iteration_bounds = array<i64: 1>, scalar_prefetch = 0 : i64, scratch_operands = 0 : i64, tpu.core_type = #tpu.core_type<tc>, window_params = [{pipeline_mode = #tpu.pipeline_mode<synchronous>, transform_indices = @transform_0, window_bounds = array<i64: 16, 128>}, {pipeline_mode = #tpu.pipeline_mode<synchronous>, transform_indices = @transform_1, window_bounds = array<i64: 8, 22>}, {pipeline_mode = #tpu.pipeline_mode<synchronous>, transform_indices = @transform_2, window_bounds = array<i64: 8, 128>}, {pipeline_mode = #tpu.pipeline_mode<synchronous>, transform_indices = @transform_3, window_bounds = array<i64: 128, 512>}, {pipeline_mode = #tpu.pipeline_mode<synchronous>, transform_indices = @transform_4, window_bounds = array<i64: 1, 512>}, {pipeline_mode = #tpu.pipeline_mode<synchronous>, transform_indices = @transform_5, window_bounds = array<i64: 1, 8>}]} {
    %c0 = arith.constant 0 : index
    %c0_0 = arith.constant 0 : index
    %0 = vector.load %arg1[%c0, %c0_0] : memref<16x128xf32, #tpu.memory_space<vmem>>, vector<16x128xf32>
    %c0_1 = arith.constant 0 : index
    %c0_2 = arith.constant 0 : index
    %1 = vector.load %arg2[%c0_1, %c0_2] : memref<8x22xf32, #tpu.memory_space<vmem>>, vector<8x22xf32>
    %c0_3 = arith.constant 0 : index
    %c0_4 = arith.constant 0 : index
    %2 = vector.load %arg3[%c0_3, %c0_4] : memref<8x128xf32, #tpu.memory_space<vmem>>, vector<8x128xf32>
    %3 = vector.extract_strided_slice %0 {offsets = [0, 0], sizes = [8, 128], strides = [1, 1]} : vector<16x128xf32> to vector<8x128xf32>
    %4 = tpu.iota {dimensions = array<i32: 1>} : vector<8x128xi32>
    %c99_i32 = arith.constant 99 : i32
    %5 = vector.broadcast %c99_i32 : i32 to vector<8x128xi32>
    %6 = arith.cmpi slt, %4, %5 : vector<8x128xi32>
    %7 = arith.extui %6 : vector<8x128xi1> to vector<8x128xi32>
    %8 = arith.sitofp %7 : vector<8x128xi32> to vector<8x128xf32>
    %c99_i32_5 = arith.constant 99 : i32
    %9 = vector.broadcast %c99_i32_5 : i32 to vector<8x128xi32>
    %10 = arith.cmpi sge, %4, %9 : vector<8x128xi32>
    %11 = arith.extui %10 : vector<8x128xi1> to vector<8x128xi32>
    %12 = arith.sitofp %11 : vector<8x128xi32> to vector<8x128xf32>
    %13 = vector.extract_strided_slice %1 {offsets = [0, 0], sizes = [8, 4], strides = [1, 1]} : vector<8x22xf32> to vector<8x4xf32>
    %14 = vector.extract_strided_slice %1 {offsets = [0, 4], sizes = [8, 1], strides = [1, 1]} : vector<8x22xf32> to vector<8x1xf32>
    %15 = vector.extract_strided_slice %1 {offsets = [0, 5], sizes = [8, 1], strides = [1, 1]} : vector<8x22xf32> to vector<8x1xf32>
    %16 = vector.extract_strided_slice %1 {offsets = [0, 6], sizes = [8, 1], strides = [1, 1]} : vector<8x22xf32> to vector<8x1xf32>
    %17 = vector.extract_strided_slice %1 {offsets = [0, 7], sizes = [8, 1], strides = [1, 1]} : vector<8x22xf32> to vector<8x1xf32>
    %18 = vector.extract_strided_slice %1 {offsets = [0, 8], sizes = [8, 1], strides = [1, 1]} : vector<8x22xf32> to vector<8x1xf32>
    %19 = vector.extract_strided_slice %1 {offsets = [0, 9], sizes = [8, 1], strides = [1, 1]} : vector<8x22xf32> to vector<8x1xf32>
    %20 = vector.extract_strided_slice %1 {offsets = [0, 10], sizes = [8, 1], strides = [1, 1]} : vector<8x22xf32> to vector<8x1xf32>
    %21 = vector.extract_strided_slice %1 {offsets = [0, 11], sizes = [8, 1], strides = [1, 1]} : vector<8x22xf32> to vector<8x1xf32>
    %22 = vector.extract_strided_slice %1 {offsets = [0, 12], sizes = [8, 1], strides = [1, 1]} : vector<8x22xf32> to vector<8x1xf32>
    %23 = vector.extract_strided_slice %1 {offsets = [0, 13], sizes = [8, 1], strides = [1, 1]} : vector<8x22xf32> to vector<8x1xf32>
    %24 = vector.extract_strided_slice %1 {offsets = [0, 14], sizes = [8, 1], strides = [1, 1]} : vector<8x22xf32> to vector<8x1xf32>
    %25 = vector.extract_strided_slice %1 {offsets = [0, 15], sizes = [8, 1], strides = [1, 1]} : vector<8x22xf32> to vector<8x1xf32>
    %26 = vector.extract_strided_slice %1 {offsets = [0, 16], sizes = [8, 1], strides = [1, 1]} : vector<8x22xf32> to vector<8x1xf32>
    %27 = vector.extract_strided_slice %1 {offsets = [0, 17], sizes = [8, 1], strides = [1, 1]} : vector<8x22xf32> to vector<8x1xf32>
    %28 = vector.extract_strided_slice %1 {offsets = [0, 18], sizes = [8, 1], strides = [1, 1]} : vector<8x22xf32> to vector<8x1xf32>
    %29 = vector.extract_strided_slice %1 {offsets = [0, 19], sizes = [8, 1], strides = [1, 1]} : vector<8x22xf32> to vector<8x1xf32>
    %30 = vector.extract_strided_slice %1 {offsets = [0, 20], sizes = [8, 1], strides = [1, 1]} : vector<8x22xf32> to vector<8x1xf32>
    %31 = vector.extract_strided_slice %1 {offsets = [0, 21], sizes = [8, 1], strides = [1, 1]} : vector<8x22xf32> to vector<8x1xf32>
    %32 = arith.fptosi %31 : vector<8x1xf32> to vector<8x1xi32>
    %c0_6 = arith.constant 0 : index
    %c0_7 = arith.constant 0 : index
    %33 = vector.load %arg5[%c0_6, %c0_7] : memref<1x512xf32, #tpu.memory_space<vmem>>, vector<1x512xf32>
    %34 = arith.truncf %0 : vector<16x128xf32> to vector<16x128xbf16>
    %c0_8 = arith.constant 0 : index
    %c0_9 = arith.constant 0 : index
    %35 = vector.load %arg4[%c0_8, %c0_9] : memref<128x512xbf16, #tpu.memory_space<vmem>>, vector<128x512xbf16>
    %cst = arith.constant dense<0.000000e+00> : vector<16x512xf32>
    %36 = tpu.matmul %34, %35, %cst {dimension_numbers = #tpu.dot_dimension_numbers<[1], [0], [0], [1], [0, 0, 1, 1], [], []>} : vector<16x128xbf16>, vector<128x512xbf16>, vector<16x512xf32> -> vector<16x512xf32>
    %37 = vector.broadcast %33 : vector<1x512xf32> to vector<16x512xf32>
    %38 = arith.addf %37, %36 : vector<16x512xf32>
    %39 = vector.extract_strided_slice %38 {offsets = [0, 384], sizes = [8, 128], strides = [1, 1]} : vector<16x512xf32> to vector<8x128xf32>
    %40 = tpu.iota {dimensions = array<i32: 1>} : vector<8x128xi32>
    %c16_i32 = arith.constant 16 : i32
    %41 = vector.broadcast %c16_i32 : i32 to vector<8x128xi32>
    %42 = arith.cmpi slt, %40, %41 : vector<8x128xi32>
    %cst_10 = arith.constant -1.000000e+30 : f32
    %43 = vector.broadcast %cst_10 : f32 to vector<8x128xf32>
    %44 = arith.select %42, %39, %43 : vector<8x128xi1>, vector<8x128xf32>
    %cst_11 = arith.constant dense<0xFF800000> : vector<8xf32>
    %45 = vector.multi_reduction <maximumf>, %44, %cst_11 [1] : vector<8x128xf32> to vector<8xf32>
    %46 = vector.shape_cast %45 : vector<8xf32> to vector<8x1xf32>
    %47 = vector.broadcast %46 : vector<8x1xf32> to vector<8x128xf32>
    %48 = arith.subf %44, %47 : vector<8x128xf32>
    %49 = math.exp %48 : vector<8x128xf32>
    %cst_12 = arith.constant dense<0.000000e+00> : vector<8xf32>
    %50 = vector.multi_reduction <add>, %49, %cst_12 [1] : vector<8x128xf32> to vector<8xf32>
    %51 = vector.shape_cast %50 : vector<8xf32> to vector<8x1xf32>
    %52 = math.log %51 : vector<8x1xf32>
    %53 = arith.addf %46, %52 : vector<8x1xf32>
    %54 = vector.broadcast %32 : vector<8x1xi32> to vector<8x128xi32>
    %55 = arith.cmpi eq, %40, %54 : vector<8x128xi32>
    %56 = arith.extui %55 : vector<8x128xi1> to vector<8x128xi32>
    %57 = arith.sitofp %56 : vector<8x128xi32> to vector<8x128xf32>
    %58 = arith.mulf %39, %57 : vector<8x128xf32>
    %cst_13 = arith.constant dense<0.000000e+00> : vector<8xf32>
    %59 = vector.multi_reduction <add>, %58, %cst_13 [1] : vector<8x128xf32> to vector<8xf32>
    %60 = vector.shape_cast %59 : vector<8xf32> to vector<8x1xf32>
    %61 = arith.subf %53, %60 : vector<8x1xf32>
    %62 = arith.mulf %29, %61 : vector<8x1xf32>
    %63 = arith.mulf %13, %13 : vector<8x4xf32>
    %cst_14 = arith.constant dense<0.000000e+00> : vector<8xf32>
    %64 = vector.multi_reduction <add>, %63, %cst_14 [1] : vector<8x4xf32> to vector<8xf32>
    %65 = vector.shape_cast %64 : vector<8xf32> to vector<8x1xf32>
    %cst_15 = arith.constant 9.99999996E-13 : f32
    %66 = vector.broadcast %cst_15 : f32 to vector<8x1xf32>
    %67 = arith.addf %65, %66 : vector<8x1xf32>
    %68 = math.rsqrt %67 : vector<8x1xf32>
    %69 = vector.extract_strided_slice %13 {offsets = [0, 0], sizes = [8, 1], strides = [1, 1]} : vector<8x4xf32> to vector<8x1xf32>
    %70 = arith.mulf %69, %68 : vector<8x1xf32>
    %71 = vector.extract_strided_slice %13 {offsets = [0, 1], sizes = [8, 1], strides = [1, 1]} : vector<8x4xf32> to vector<8x1xf32>
    %72 = arith.mulf %71, %68 : vector<8x1xf32>
    %73 = vector.extract_strided_slice %13 {offsets = [0, 2], sizes = [8, 1], strides = [1, 1]} : vector<8x4xf32> to vector<8x1xf32>
    %74 = arith.mulf %73, %68 : vector<8x1xf32>
    %75 = vector.extract_strided_slice %13 {offsets = [0, 3], sizes = [8, 1], strides = [1, 1]} : vector<8x4xf32> to vector<8x1xf32>
    %76 = arith.mulf %75, %68 : vector<8x1xf32>
    %77 = arith.mulf %74, %74 : vector<8x1xf32>
    %78 = arith.mulf %76, %76 : vector<8x1xf32>
    %79 = arith.addf %77, %78 : vector<8x1xf32>
    %cst_16 = arith.constant 2.000000e+00 : f32
    %80 = vector.broadcast %cst_16 : f32 to vector<8x1xf32>
    %81 = arith.mulf %80, %79 : vector<8x1xf32>
    %cst_17 = arith.constant 1.000000e+00 : f32
    %82 = vector.broadcast %cst_17 : f32 to vector<8x1xf32>
    %83 = arith.subf %82, %81 : vector<8x1xf32>
    %84 = arith.mulf %72, %74 : vector<8x1xf32>
    %85 = arith.mulf %70, %76 : vector<8x1xf32>
    %86 = arith.subf %84, %85 : vector<8x1xf32>
    %cst_18 = arith.constant 2.000000e+00 : f32
    %87 = vector.broadcast %cst_18 : f32 to vector<8x1xf32>
    %88 = arith.mulf %87, %86 : vector<8x1xf32>
    %89 = arith.mulf %72, %76 : vector<8x1xf32>
    %90 = arith.mulf %70, %74 : vector<8x1xf32>
    %91 = arith.addf %89, %90 : vector<8x1xf32>
    %cst_19 = arith.constant 2.000000e+00 : f32
    %92 = vector.broadcast %cst_19 : f32 to vector<8x1xf32>
    %93 = arith.mulf %92, %91 : vector<8x1xf32>
    %94 = arith.mulf %72, %74 : vector<8x1xf32>
    %95 = arith.mulf %70, %76 : vector<8x1xf32>
    %96 = arith.addf %94, %95 : vector<8x1xf32>
    %cst_20 = arith.constant 2.000000e+00 : f32
    %97 = vector.broadcast %cst_20 : f32 to vector<8x1xf32>
    %98 = arith.mulf %97, %96 : vector<8x1xf32>
    %99 = arith.mulf %72, %72 : vector<8x1xf32>
    %100 = arith.mulf %76, %76 : vector<8x1xf32>
    %101 = arith.addf %99, %100 : vector<8x1xf32>
    %cst_21 = arith.constant 2.000000e+00 : f32
    %102 = vector.broadcast %cst_21 : f32 to vector<8x1xf32>
    %103 = arith.mulf %102, %101 : vector<8x1xf32>
    %cst_22 = arith.constant 1.000000e+00 : f32
    %104 = vector.broadcast %cst_22 : f32 to vector<8x1xf32>
    %105 = arith.subf %104, %103 : vector<8x1xf32>
    %106 = arith.mulf %74, %76 : vector<8x1xf32>
    %107 = arith.mulf %70, %72 : vector<8x1xf32>
    %108 = arith.subf %106, %107 : vector<8x1xf32>
    %cst_23 = arith.constant 2.000000e+00 : f32
    %109 = vector.broadcast %cst_23 : f32 to vector<8x1xf32>
    %110 = arith.mulf %109, %108 : vector<8x1xf32>
    %111 = arith.mulf %72, %76 : vector<8x1xf32>
    %112 = arith.mulf %70, %74 : vector<8x1xf32>
    %113 = arith.subf %111, %112 : vector<8x1xf32>
    %cst_24 = arith.constant 2.000000e+00 : f32
    %114 = vector.broadcast %cst_24 : f32 to vector<8x1xf32>
    %115 = arith.mulf %114, %113 : vector<8x1xf32>
    %116 = arith.mulf %74, %76 : vector<8x1xf32>
    %117 = arith.mulf %70, %72 : vector<8x1xf32>
    %118 = arith.addf %116, %117 : vector<8x1xf32>
    %cst_25 = arith.constant 2.000000e+00 : f32
    %119 = vector.broadcast %cst_25 : f32 to vector<8x1xf32>
    %120 = arith.mulf %119, %118 : vector<8x1xf32>
    %121 = arith.mulf %72, %72 : vector<8x1xf32>
    %122 = arith.mulf %74, %74 : vector<8x1xf32>
    %123 = arith.addf %121, %122 : vector<8x1xf32>
    %cst_26 = arith.constant 2.000000e+00 : f32
    %124 = vector.broadcast %cst_26 : f32 to vector<8x1xf32>
    %125 = arith.mulf %124, %123 : vector<8x1xf32>
    %cst_27 = arith.constant 1.000000e+00 : f32
    %126 = vector.broadcast %cst_27 : f32 to vector<8x1xf32>
    %127 = arith.subf %126, %125 : vector<8x1xf32>
    %128 = arith.mulf %115, %115 : vector<8x1xf32>
    %cst_28 = arith.constant 1.000000e+00 : f32
    %129 = vector.broadcast %cst_28 : f32 to vector<8x1xf32>
    %130 = arith.subf %129, %128 : vector<8x1xf32>
    %cst_29 = arith.constant 0.000000e+00 : f32
    %131 = vector.broadcast %cst_29 : f32 to vector<8x1xf32>
    %132 = arith.maximumf %130, %131 : vector<8x1xf32>
    %133 = math.sqrt %132 : vector<8x1xf32>
    %134 = arith.mulf %120, %120 : vector<8x1xf32>
    %135 = arith.mulf %127, %127 : vector<8x1xf32>
    %136 = arith.addf %134, %135 : vector<8x1xf32>
    %cst_30 = arith.constant 9.99999996E-13 : f32
    %137 = vector.broadcast %cst_30 : f32 to vector<8x1xf32>
    %138 = arith.addf %136, %137 : vector<8x1xf32>
    %139 = math.rsqrt %138 : vector<8x1xf32>
    %140 = arith.mulf %127, %139 : vector<8x1xf32>
    %141 = arith.mulf %83, %83 : vector<8x1xf32>
    %142 = arith.mulf %98, %98 : vector<8x1xf32>
    %143 = arith.addf %141, %142 : vector<8x1xf32>
    %cst_31 = arith.constant 9.99999996E-13 : f32
    %144 = vector.broadcast %cst_31 : f32 to vector<8x1xf32>
    %145 = arith.addf %143, %144 : vector<8x1xf32>
    %146 = math.rsqrt %145 : vector<8x1xf32>
    %147 = arith.mulf %83, %146 : vector<8x1xf32>
    %148 = arith.mulf %12, %3 : vector<8x128xf32>
    %149 = arith.mulf %148, %3 : vector<8x128xf32>
    %cst_32 = arith.constant dense<0.000000e+00> : vector<8xf32>
    %150 = vector.multi_reduction <add>, %149, %cst_32 [1] : vector<8x128xf32> to vector<8xf32>
    %151 = vector.shape_cast %150 : vector<8xf32> to vector<8x1xf32>
    %152 = math.sqrt %151 : vector<8x1xf32>
    %cst_33 = arith.constant 1.000000e+00 : f32
    %153 = vector.broadcast %cst_33 : f32 to vector<8x1xf32>
    %154 = arith.addf %153, %152 : vector<8x1xf32>
    %155 = tpu.reciprocal %154 {approx = true} : vector<8x1xf32> -> vector<8x1xf32>
    %156 = arith.addf %133, %140 : vector<8x1xf32>
    %157 = arith.addf %156, %147 : vector<8x1xf32>
    %158 = arith.addf %157, %155 : vector<8x1xf32>
    %cst_34 = arith.constant 2.500000e-01 : f32
    %159 = vector.broadcast %cst_34 : f32 to vector<8x1xf32>
    %160 = arith.mulf %158, %159 : vector<8x1xf32>
    %161 = arith.subf %3, %2 : vector<8x128xf32>
    %cst_35 = arith.constant 5.000000e-01 : f32
    %162 = vector.broadcast %cst_35 : f32 to vector<8x1xf32>
    %163 = arith.mulf %29, %162 : vector<8x1xf32>
    %164 = arith.mulf %8, %161 : vector<8x128xf32>
    %165 = arith.mulf %164, %161 : vector<8x128xf32>
    %cst_36 = arith.constant dense<0.000000e+00> : vector<8xf32>
    %166 = vector.multi_reduction <add>, %165, %cst_36 [1] : vector<8x128xf32> to vector<8xf32>
    %167 = vector.shape_cast %166 : vector<8xf32> to vector<8x1xf32>
    %168 = arith.mulf %163, %167 : vector<8x1xf32>
    %169 = arith.mulf %160, %168 : vector<8x1xf32>
    %170 = vector.extract_strided_slice %38 {offsets = [0, 0], sizes = [8, 128], strides = [1, 1]} : vector<16x512xf32> to vector<8x128xf32>
    %171 = vector.extract_strided_slice %38 {offsets = [0, 128], sizes = [8, 128], strides = [1, 1]} : vector<16x512xf32> to vector<8x128xf32>
    %172 = vector.extract_strided_slice %38 {offsets = [0, 256], sizes = [8, 128], strides = [1, 1]} : vector<16x512xf32> to vector<8x128xf32>
    %173 = vector.extract_strided_slice %38 {offsets = [8, 0], sizes = [8, 128], strides = [1, 1]} : vector<16x512xf32> to vector<8x128xf32>
    %174 = vector.extract_strided_slice %38 {offsets = [8, 128], sizes = [8, 128], strides = [1, 1]} : vector<16x512xf32> to vector<8x128xf32>
    %175 = vector.extract_strided_slice %38 {offsets = [8, 256], sizes = [8, 128], strides = [1, 1]} : vector<16x512xf32> to vector<8x128xf32>
    %176 = vector.broadcast %83 : vector<8x1xf32> to vector<8x128xf32>
    %177 = arith.mulf %176, %170 : vector<8x128xf32>
    %178 = vector.broadcast %88 : vector<8x1xf32> to vector<8x128xf32>
    %179 = arith.mulf %178, %171 : vector<8x128xf32>
    %180 = arith.addf %177, %179 : vector<8x128xf32>
    %181 = vector.broadcast %93 : vector<8x1xf32> to vector<8x128xf32>
    %182 = arith.mulf %181, %172 : vector<8x128xf32>
    %183 = arith.addf %180, %182 : vector<8x128xf32>
    %184 = vector.broadcast %14 : vector<8x1xf32> to vector<8x128xf32>
    %185 = arith.addf %183, %184 : vector<8x128xf32>
    %186 = vector.broadcast %98 : vector<8x1xf32> to vector<8x128xf32>
    %187 = arith.mulf %186, %170 : vector<8x128xf32>
    %188 = vector.broadcast %105 : vector<8x1xf32> to vector<8x128xf32>
    %189 = arith.mulf %188, %171 : vector<8x128xf32>
    %190 = arith.addf %187, %189 : vector<8x128xf32>
    %191 = vector.broadcast %110 : vector<8x1xf32> to vector<8x128xf32>
    %192 = arith.mulf %191, %172 : vector<8x128xf32>
    %193 = arith.addf %190, %192 : vector<8x128xf32>
    %194 = vector.broadcast %15 : vector<8x1xf32> to vector<8x128xf32>
    %195 = arith.addf %193, %194 : vector<8x128xf32>
    %196 = vector.broadcast %115 : vector<8x1xf32> to vector<8x128xf32>
    %197 = arith.mulf %196, %170 : vector<8x128xf32>
    %198 = vector.broadcast %120 : vector<8x1xf32> to vector<8x128xf32>
    %199 = arith.mulf %198, %171 : vector<8x128xf32>
    %200 = arith.addf %197, %199 : vector<8x128xf32>
    %201 = vector.broadcast %127 : vector<8x1xf32> to vector<8x128xf32>
    %202 = arith.mulf %201, %172 : vector<8x128xf32>
    %203 = arith.addf %200, %202 : vector<8x128xf32>
    %204 = vector.broadcast %16 : vector<8x1xf32> to vector<8x128xf32>
    %205 = arith.addf %203, %204 : vector<8x128xf32>
    %206 = vector.broadcast %17 : vector<8x1xf32> to vector<8x128xf32>
    %207 = arith.mulf %206, %173 : vector<8x128xf32>
    %208 = vector.broadcast %18 : vector<8x1xf32> to vector<8x128xf32>
    %209 = arith.mulf %208, %174 : vector<8x128xf32>
    %210 = arith.addf %207, %209 : vector<8x128xf32>
    %211 = vector.broadcast %19 : vector<8x1xf32> to vector<8x128xf32>
    %212 = arith.mulf %211, %175 : vector<8x128xf32>
    %213 = arith.addf %210, %212 : vector<8x128xf32>
    %214 = vector.broadcast %20 : vector<8x1xf32> to vector<8x128xf32>
    %215 = arith.addf %213, %214 : vector<8x128xf32>
    %216 = vector.broadcast %21 : vector<8x1xf32> to vector<8x128xf32>
    %217 = arith.mulf %216, %173 : vector<8x128xf32>
    %218 = vector.broadcast %22 : vector<8x1xf32> to vector<8x128xf32>
    %219 = arith.mulf %218, %174 : vector<8x128xf32>
    %220 = arith.addf %217, %219 : vector<8x128xf32>
    %221 = vector.broadcast %23 : vector<8x1xf32> to vector<8x128xf32>
    %222 = arith.mulf %221, %175 : vector<8x128xf32>
    %223 = arith.addf %220, %222 : vector<8x128xf32>
    %224 = vector.broadcast %24 : vector<8x1xf32> to vector<8x128xf32>
    %225 = arith.addf %223, %224 : vector<8x128xf32>
    %226 = vector.broadcast %25 : vector<8x1xf32> to vector<8x128xf32>
    %227 = arith.mulf %226, %173 : vector<8x128xf32>
    %228 = vector.broadcast %26 : vector<8x1xf32> to vector<8x128xf32>
    %229 = arith.mulf %228, %174 : vector<8x128xf32>
    %230 = arith.addf %227, %229 : vector<8x128xf32>
    %231 = vector.broadcast %27 : vector<8x1xf32> to vector<8x128xf32>
    %232 = arith.mulf %231, %175 : vector<8x128xf32>
    %233 = arith.addf %230, %232 : vector<8x128xf32>
    %234 = vector.broadcast %28 : vector<8x1xf32> to vector<8x128xf32>
    %235 = arith.addf %233, %234 : vector<8x128xf32>
    %236 = arith.subf %215, %185 : vector<8x128xf32>
    %237 = arith.subf %225, %195 : vector<8x128xf32>
    %238 = arith.subf %235, %205 : vector<8x128xf32>
    %239 = arith.mulf %236, %236 : vector<8x128xf32>
    %240 = arith.mulf %237, %237 : vector<8x128xf32>
    %241 = arith.addf %239, %240 : vector<8x128xf32>
    %242 = arith.mulf %238, %238 : vector<8x128xf32>
    %243 = arith.addf %241, %242 : vector<8x128xf32>
    %244 = math.sqrt %243 : vector<8x128xf32>
    %c68_i32 = arith.constant 68 : i32
    %245 = vector.broadcast %c68_i32 : i32 to vector<8x128xi32>
    %246 = arith.cmpi slt, %40, %245 : vector<8x128xi32>
    %247 = arith.extui %246 : vector<8x128xi1> to vector<8x128xi32>
    %248 = arith.sitofp %247 : vector<8x128xi32> to vector<8x128xf32>
    %249 = arith.mulf %248, %244 : vector<8x128xf32>
    %cst_37 = arith.constant dense<0.000000e+00> : vector<8xf32>
    %250 = vector.multi_reduction <add>, %249, %cst_37 [1] : vector<8x128xf32> to vector<8xf32>
    %251 = vector.shape_cast %250 : vector<8xf32> to vector<8x1xf32>
    %cst_38 = arith.constant 0.0073529412 : f32
    %252 = vector.broadcast %cst_38 : f32 to vector<8x1xf32>
    %253 = arith.mulf %252, %251 : vector<8x1xf32>
    %254 = arith.mulf %8, %3 : vector<8x128xf32>
    %255 = arith.mulf %254, %3 : vector<8x128xf32>
    %cst_39 = arith.constant dense<0.000000e+00> : vector<8xf32>
    %256 = vector.multi_reduction <add>, %255, %cst_39 [1] : vector<8x128xf32> to vector<8xf32>
    %257 = vector.shape_cast %256 : vector<8xf32> to vector<8x1xf32>
    %258 = arith.mulf %30, %253 : vector<8x1xf32>
    %cst_40 = arith.constant 1.250000e-01 : f32
    %259 = vector.broadcast %cst_40 : f32 to vector<8x1xf32>
    %260 = arith.mulf %257, %259 : vector<8x1xf32>
    %cst_41 = arith.constant 1.250000e-01 : f32
    %261 = vector.broadcast %cst_41 : f32 to vector<8x1xf32>
    %262 = arith.mulf %151, %261 : vector<8x1xf32>
    %263 = tpu.concatenate %62, %168, %169, %258, %29, %30, %260, %262 in 1 : vector<8x1xf32>, vector<8x1xf32>, vector<8x1xf32>, vector<8x1xf32>, vector<8x1xf32>, vector<8x1xf32>, vector<8x1xf32>, vector<8x1xf32> -> vector<8x8xf32>
    %cst_42 = arith.constant dense<0.000000e+00> : vector<8xf32>
    %264 = vector.multi_reduction <add>, %263, %cst_42 [0] : vector<8x8xf32> to vector<8xf32>
    %265 = vector.shape_cast %264 : vector<8xf32> to vector<1x8xf32>
    %c0_43 = arith.constant 0 : index
    %c0_44 = arith.constant 0 : index
    %266 = vector.load %arg6[%c0_43, %c0_44] : memref<1x8xf32, #tpu.memory_space<vmem>>, vector<1x8xf32>
    tpu.vector_store %arg6[%c0_43, %c0_44], %265 {strides = array<i32>} : memref<1x8xf32, #tpu.memory_space<vmem>>, vector<1x8xf32>,
    return
  }
  func.func @transform_0(%arg0: i32) -> (i32, i32) {
    %c0_i32 = arith.constant 0 : i32
    %c0_i32_0 = arith.constant 0 : i32
    %c0_i32_1 = arith.constant 0 : i32
    return %c0_i32, %c0_i32_0 : i32, i32
  }
  func.func @transform_1(%arg0: i32) -> (i32, i32) {
    %c0_i32 = arith.constant 0 : i32
    %c0_i32_0 = arith.constant 0 : i32
    %c0_i32_1 = arith.constant 0 : i32
    return %c0_i32, %c0_i32_0 : i32, i32
  }
  func.func @transform_2(%arg0: i32) -> (i32, i32) {
    %c0_i32 = arith.constant 0 : i32
    %c0_i32_0 = arith.constant 0 : i32
    %c0_i32_1 = arith.constant 0 : i32
    return %c0_i32, %c0_i32_0 : i32, i32
  }
  func.func @transform_3(%arg0: i32) -> (i32, i32) {
    %c0_i32 = arith.constant 0 : i32
    %c0_i32_0 = arith.constant 0 : i32
    %c0_i32_1 = arith.constant 0 : i32
    return %c0_i32, %c0_i32_0 : i32, i32
  }
  func.func @transform_4(%arg0: i32) -> (i32, i32) {
    %c0_i32 = arith.constant 0 : i32
    %c0_i32_0 = arith.constant 0 : i32
    %c0_i32_1 = arith.constant 0 : i32
    return %c0_i32, %c0_i32_0 : i32, i32
  }
  func.func @transform_5(%arg0: i32) -> (i32, i32) {
    %c0_i32 = arith.constant 0 : i32
    %c0_i32_0 = arith.constant 0 : i32
    %c0_i32_1 = arith.constant 0 : i32
    return %c0_i32, %c0_i32_0 : i32, i32
  }
}

</mosaic_0001>

<llo_original>
// kernel: mixed_loss_fr_batch.1
$region0: #{mixed_loss_fr_batch.1}
  #allocation0 [shape = 'u32[]', space=smem, size = 0x4, offset = 0x4, fixed_abs, tag = 'smem constant byte address 0x4 - core index']
  #allocation1 [shape = 'u32[144,128]{1,0:T(1,128)}', space=vmem, size = 0x12000, scoped, tag = 'internal scratch']
  %s0 = inlined_call_operand.vmem [shape: f32[16,128], index: 0, kind: input, shape index: {}]
  %s1 = inlined_call_operand.vmem [shape: f32[8,22], index: 1, kind: input, shape index: {}]
  %s2 = inlined_call_operand.vmem [shape: f32[8,128], index: 2, kind: input, shape index: {}]
  %s3 = inlined_call_operand.vmem [shape: bf16[128,512], index: 3, kind: input, shape index: {}]
  %s4 = inlined_call_operand.vmem [shape: f32[1,512], index: 4, kind: input, shape index: {}]
  %s5 = inlined_call_operand.vmem [shape: f32[1,8], index: 5, kind: output, shape index: {}]
  %s6 = sld [smem:[#allocation0]]
  $region30: #{mixed_loss_fr_batch.1} parent=0
    _
  %s8 = ssub.s32 1, %s6
  %s9 = scalar_select 0, %s8, %s6
  // Predicated region
  $region2: #{mixed_loss_fr_batch.1} parent=0 // pred_check
    _
  $region3: #{mixed_loss_fr_batch.1} parent=0 // pred_check_branch
    %11 = sbr.rel (0) target = $region5
  $region4: #{mixed_loss_fr_batch.1} parent=0 // pred_region
    _
  $region5: #{mixed_loss_fr_batch.1} parent=0 // pred_fallthru
    _
  // Predicated region
  $region6: #{mixed_loss_fr_batch.1} parent=0 // pred_check
    _
  $region7: #{mixed_loss_fr_batch.1} parent=0 // pred_check_branch
    %13 = sbr.rel (0) target = $region9
  $region8: #{mixed_loss_fr_batch.1} parent=0 // pred_region
    _
  $region9: #{mixed_loss_fr_batch.1} parent=0 // pred_fallthru
    _
  // Predicated region
  $region10: #{mixed_loss_fr_batch.1} parent=0 // pred_check
    _
  $region11: #{mixed_loss_fr_batch.1} parent=0 // pred_check_branch
    %15 = sbr.rel (0) target = $region13
  $region12: #{mixed_loss_fr_batch.1} parent=0 // pred_region
    _
  $region13: #{mixed_loss_fr_batch.1} parent=0 // pred_fallthru
    _
  // Predicated region
  $region14: #{mixed_loss_fr_batch.1} parent=0 // pred_check
    _
  $region15: #{mixed_loss_fr_batch.1} parent=0 // pred_check_branch
    %17 = sbr.rel (0) target = $region17
  $region16: #{mixed_loss_fr_batch.1} parent=0 // pred_region
    _
  $region17: #{mixed_loss_fr_batch.1} parent=0 // pred_fallthru
    _
  // Predicated region
  $region18: #{mixed_loss_fr_batch.1} parent=0 // pred_check
    _
  $region19: #{mixed_loss_fr_batch.1} parent=0 // pred_check_branch
    %19 = sbr.rel (0) target = $region21
  $region20: #{mixed_loss_fr_batch.1} parent=0 // pred_region
    _
  $region21: #{mixed_loss_fr_batch.1} parent=0 // pred_fallthru
    _
  %v21 = vld [vmem:[%s0] sm:$0xff]
  %v22 = vld [vmem:[%s0 + $0x8] sm:$0xff]
  %v23 = vld [vmem:[%s1] sm:$0xff]
  %v24 = vld [vmem:[%s2] sm:$0xff]
  %v25 = vlaneseq
  %v26 = vand.u32 %v25, 127
  %vm27 = vcmp.lt.s32.totalorder %v26, 99
  %v28 = vsel %vm27, 1, 0
  %v29 = vcvt.s32.f32 %v28
  %vm30 = vcmp.ge.s32.totalorder %v26, 99
  %v31 = vsel %vm30, 1, 0
  %v32 = vcvt.s32.f32 %v31
  %v33 = vcvt.f32.s32.to.zero.pseudo %v23
  %v34 = vld [vmem:[%s4] sm:$0xf]
  %v35 = vpack.c.bf16 %v22, %v21
  %v36 = vld [vmem:[%s3] sm:$0xff]
  %v37 = vld [vmem:[%s3 + $0x8] sm:$0xff]
  %v38 = vld [vmem:[%s3 + $0x10] sm:$0xff]
  %v39 = vld [vmem:[%s3 + $0x18] sm:$0xff]
  %v40 = vld [vmem:[%s3 + $0x20] sm:$0xff]
  %v41 = vld [vmem:[%s3 + $0x28] sm:$0xff]
  %v42 = vld [vmem:[%s3 + $0x30] sm:$0xff]
  %v43 = vld [vmem:[%s3 + $0x38] sm:$0xff]
  %v44 = vld [vmem:[%s3 + $0x40] sm:$0xff]
  %v45 = vld [vmem:[%s3 + $0x48] sm:$0xff]
  %v46 = vld [vmem:[%s3 + $0x50] sm:$0xff]
  %v47 = vld [vmem:[%s3 + $0x58] sm:$0xff]
  %v48 = vld [vmem:[%s3 + $0x60] sm:$0xff]
  %v49 = vld [vmem:[%s3 + $0x68] sm:$0xff]
  %v50 = vld [vmem:[%s3 + $0x70] sm:$0xff]
  %v51 = vld [vmem:[%s3 + $0x78] sm:$0xff]
  %v52 = vld [vmem:[%s3 + $0x80] sm:$0xff]
  %v53 = vld [vmem:[%s3 + $0x88] sm:$0xff]
  %v54 = vld [vmem:[%s3 + $0x90] sm:$0xff]
  %v55 = vld [vmem:[%s3 + $0x98] sm:$0xff]
  %v56 = vld [vmem:[%s3 + $0xa0] sm:$0xff]
  %v57 = vld [vmem:[%s3 + $0xa8] sm:$0xff]
  %v58 = vld [vmem:[%s3 + $0xb0] sm:$0xff]
  %v59 = vld [vmem:[%s3 + $0xb8] sm:$0xff]
  %v60 = vld [vmem:[%s3 + $0xc0] sm:$0xff]
  %v61 = vld [vmem:[%s3 + $0xc8] sm:$0xff]
  %v62 = vld [vmem:[%s3 + $0xd0] sm:$0xff]
  %v63 = vld [vmem:[%s3 + $0xd8] sm:$0xff]
  %v64 = vld [vmem:[%s3 + $0xe0] sm:$0xff]
  %v65 = vld [vmem:[%s3 + $0xe8] sm:$0xff]
  %v66 = vld [vmem:[%s3 + $0xf0] sm:$0xff]
  %v67 = vld [vmem:[%s3 + $0xf8] sm:$0xff]
  %v100 = vunpack.c.l.b16 %v36
  %v101 = vunpack.c.h.b16 %v36
  %v102 = vunpack.c.l.b16 %v37
  %v103 = vunpack.c.h.b16 %v37
  %v104 = vunpack.c.l.b16 %v38
  %v105 = vunpack.c.h.b16 %v38
  %v106 = vunpack.c.l.b16 %v39
  %v107 = vunpack.c.h.b16 %v39
  %v108 = vunpack.c.l.b16 %v40
  %v109 = vunpack.c.h.b16 %v40
  %v110 = vunpack.c.l.b16 %v41
  %v111 = vunpack.c.h.b16 %v41
  %v112 = vunpack.c.l.b16 %v42
  %v113 = vunpack.c.h.b16 %v42
  %v114 = vunpack.c.l.b16 %v43
  %v115 = vunpack.c.h.b16 %v43
  %v116 = vunpack.c.l.b16 %v44
  %v117 = vunpack.c.h.b16 %v44
  %v118 = vunpack.c.l.b16 %v45
  %v119 = vunpack.c.h.b16 %v45
  %v120 = vunpack.c.l.b16 %v46
  %v121 = vunpack.c.h.b16 %v46
  %v122 = vunpack.c.l.b16 %v47
  %v123 = vunpack.c.h.b16 %v47
  %v124 = vunpack.c.l.b16 %v48
  %v125 = vunpack.c.h.b16 %v48
  %v126 = vunpack.c.l.b16 %v49
  %v127 = vunpack.c.h.b16 %v49
  %v128 = vunpack.c.l.b16 %v50
  %v129 = vunpack.c.h.b16 %v50
  %v130 = vunpack.c.l.b16 %v51
  %v131 = vunpack.c.h.b16 %v51
  %v132 = vunpack.c.l.b16 %v52
  %v133 = vunpack.c.h.b16 %v52
  %v134 = vunpack.c.l.b16 %v53
  %v135 = vunpack.c.h.b16 %v53
  %v136 = vunpack.c.l.b16 %v54
  %v137 = vunpack.c.h.b16 %v54
  %v138 = vunpack.c.l.b16 %v55
  %v139 = vunpack.c.h.b16 %v55
  %v140 = vunpack.c.l.b16 %v56
  %v141 = vunpack.c.h.b16 %v56
  %v142 = vunpack.c.l.b16 %v57
  %v143 = vunpack.c.h.b16 %v57
  %v144 = vunpack.c.l.b16 %v58
  %v145 = vunpack.c.h.b16 %v58
  %v146 = vunpack.c.l.b16 %v59
  %v147 = vunpack.c.h.b16 %v59
  %v148 = vunpack.c.l.b16 %v60
  %v149 = vunpack.c.h.b16 %v60
  %v150 = vunpack.c.l.b16 %v61
  %v151 = vunpack.c.h.b16 %v61
  %v152 = vunpack.c.l.b16 %v62
  %v153 = vunpack.c.h.b16 %v62
  %v154 = vunpack.c.l.b16 %v63
  %v155 = vunpack.c.h.b16 %v63
  %v156 = vunpack.c.l.b16 %v64
  %v157 = vunpack.c.h.b16 %v64
  %v158 = vunpack.c.l.b16 %v65
  %v159 = vunpack.c.h.b16 %v65
  %v160 = vunpack.c.l.b16 %v66
  %v161 = vunpack.c.h.b16 %v66
  %v162 = vunpack.c.l.b16 %v67
  %v163 = vunpack.c.h.b16 %v67
  %v164 = vpack.c.b16 %v104, %v100
  %v165 = vpack.c.b16 %v105, %v101
  %v166 = vpack.c.b16 %v106, %v102
  %v167 = vpack.c.b16 %v107, %v103
  %v168 = vpack.c.b16 %v112, %v108
  %v169 = vpack.c.b16 %v113, %v109
  %v170 = vpack.c.b16 %v114, %v110
  %v171 = vpack.c.b16 %v115, %v111
  %v172 = vpack.c.b16 %v120, %v116
  %v173 = vpack.c.b16 %v121, %v117
  %v174 = vpack.c.b16 %v122, %v118
  %v175 = vpack.c.b16 %v123, %v119
  %v176 = vpack.c.b16 %v128, %v124
  %v177 = vpack.c.b16 %v129, %v125
  %v178 = vpack.c.b16 %v130, %v126
  %v179 = vpack.c.b16 %v131, %v127
  %v180 = vpack.c.b16 %v136, %v132
  %v181 = vpack.c.b16 %v137, %v133
  %v182 = vpack.c.b16 %v138, %v134
  %v183 = vpack.c.b16 %v139, %v135
  %v184 = vpack.c.b16 %v144, %v140
  %v185 = vpack.c.b16 %v145, %v141
  %v186 = vpack.c.b16 %v146, %v142
  %v187 = vpack.c.b16 %v147, %v143
  %v188 = vpack.c.b16 %v152, %v148
  %v189 = vpack.c.b16 %v153, %v149
  %v190 = vpack.c.b16 %v154, %v150
  %v191 = vpack.c.b16 %v155, %v151
  %v192 = vpack.c.b16 %v160, %v156
  %v193 = vpack.c.b16 %v161, %v157
  %v194 = vpack.c.b16 %v162, %v158
  %v195 = vpack.c.b16 %v163, %v159
  %228 = vmatprep.subr.bf16.mxu0 %v165
  %229 = vmatpush1.bf16.msra.mxu0 %v164
  %230 = vmatprep.subr.bf16.mxu0 %v169
  %231 = vmatpush1.bf16.msra.mxu0 %v168
  %232 = vmatprep.subr.bf16.mxu0 %v173
  %233 = vmatpush1.bf16.msra.mxu0 %v172
  %234 = vmatprep.subr.bf16.mxu0 %v177
  %235 = vmatpush1.bf16.msra.mxu0 %v176
  %236 = vmatprep.subr.bf16.mxu0 %v181
  %237 = vmatpush1.bf16.msra.mxu0 %v180
  %238 = vmatprep.subr.bf16.mxu0 %v185
  %239 = vmatpush1.bf16.msra.mxu0 %v184
  %240 = vmatprep.subr.bf16.mxu0 %v189
  %241 = vmatpush1.bf16.msra.mxu0 %v188
  %242 = vmatprep.subr.bf16.mxu0 %v193
  %243 = vmatpush1.bf16.msra.mxu0 %v192
  %244 = vmatprep.subr.bf16.mxu0 0
  %245 = vmatpush1.bf16.msra.mxu0 0
  %246 = vmatprep.subr.bf16.mxu0 0
  %247 = vmatpush1.bf16.msra.mxu0 0
  %248 = vmatprep.subr.bf16.mxu0 0
  %249 = vmatpush1.bf16.msra.mxu0 0
  %250 = vmatprep.subr.bf16.mxu0 0
  %251 = vmatpush1.bf16.msra.mxu0 0
  %252 = vmatprep.subr.bf16.mxu0 0
  %253 = vmatpush1.bf16.msra.mxu0 0
  %254 = vmatprep.subr.bf16.mxu0 0
  %255 = vmatpush1.bf16.msra.mxu0 0
  %256 = vmatprep.subr.bf16.mxu0 0
  %257 = vmatpush1.bf16.msra.mxu0 0
  %258 = vmatprep.subr.bf16.mxu0 0
  %259 = vmatpush1.bf16.msra.mxu0 0
  %260 = vmatprep.mubr.bf16.mxu0 0
  %261 = vmatmul.mubr.bf16.gmra.mrb[0].mxu0 %v35
  %v262 = vpop.f32.mrb[0].mxu0
  %v263 = vadd.f32 0.0, %v262
  %v264 = vpop.f32.mrb[0].mxu0
  %v265 = vadd.f32 0.0, %v264
  %v266 = vpop.f32.mrb[0].mxu0
  %v267 = vadd.f32 0.0, %v266
  %v268 = vpop.f32.mrb[0].mxu0
  %v269 = vadd.f32 0.0, %v268
  %270 = vdwg.mxu0
  %271 = vmatprep.subr.bf16.mxu0 %v167
  %272 = vmatpush1.bf16.msra.mxu0 %v166
  %273 = vmatprep.subr.bf16.mxu0 %v171
  %274 = vmatpush1.bf16.msra.mxu0 %v170
  %275 = vmatprep.subr.bf16.mxu0 %v175
  %276 = vmatpush1.bf16.msra.mxu0 %v174
  %277 = vmatprep.subr.bf16.mxu0 %v179
  %278 = vmatpush1.bf16.msra.mxu0 %v178
  %279 = vmatprep.subr.bf16.mxu0 %v183
  %280 = vmatpush1.bf16.msra.mxu0 %v182
  %281 = vmatprep.subr.bf16.mxu0 %v187
  %282 = vmatpush1.bf16.msra.mxu0 %v186
  %283 = vmatprep.subr.bf16.mxu0 %v191
  %284 = vmatpush1.bf16.msra.mxu0 %v190
  %285 = vmatprep.subr.bf16.mxu0 %v195
  %286 = vmatpush1.bf16.msra.mxu0 %v194
  %287 = vmatprep.subr.bf16.mxu0 0
  %288 = vmatpush1.bf16.msra.mxu0 0
  %289 = vmatprep.subr.bf16.mxu0 0
  %290 = vmatpush1.bf16.msra.mxu0 0
  %291 = vmatprep.subr.bf16.mxu0 0
  %292 = vmatpush1.bf16.msra.mxu0 0
  %293 = vmatprep.subr.bf16.mxu0 0
  %294 = vmatpush1.bf16.msra.mxu0 0
  %295 = vmatprep.subr.bf16.mxu0 0
  %296 = vmatpush1.bf16.msra.mxu0 0
  %297 = vmatprep.subr.bf16.mxu0 0
  %298 = vmatpush1.bf16.msra.mxu0 0
  %299 = vmatprep.subr.bf16.mxu0 0
  %300 = vmatpush1.bf16.msra.mxu0 0
  %301 = vmatprep.subr.bf16.mxu0 0
  %302 = vmatpush1.bf16.msra.mxu0 0
  %303 = vmatprep.mubr.bf16.mxu0 0
  %304 = vmatmul.mubr.bf16.gmra.mrb[0].mxu0 %v35
  %v305 = vpop.f32.mrb[0].mxu0
  %v306 = vadd.f32 0.0, %v305
  %v307 = vpop.f32.mrb[0].mxu0
  %v308 = vadd.f32 0.0, %v307
  %v309 = vpop.f32.mrb[0].mxu0
  %v310 = vadd.f32 0.0, %v309
  %v311 = vpop.f32.mrb[0].mxu0
  %312 = vdwg.mxu0
  %v314 = vlaneseq
  %v315 = vshrl.u32 %v314, 7
  %v316 = vsub.s32 0, %v315
  %v317 = vrot.slane %v34, %v316
  %v318 = vlaneseq
  %v319 = vshrl.u32 %v318, 7
  %v320 = vsub.s32 1, %v319
  %v321 = vrot.slane %v34, %v320
  %v322 = vlaneseq
  %v323 = vshrl.u32 %v322, 7
  %v324 = vsub.s32 2, %v323
  %v325 = vrot.slane %v34, %v324
  %v326 = vlaneseq
  %v327 = vshrl.u32 %v326, 7
  %v328 = vsub.s32 3, %v327
  %v329 = vrot.slane %v34, %v328
  %v334 = vadd.f32 %v317, %v263
  %v335 = vadd.f32 %v321, %v265
  %v336 = vadd.f32 %v325, %v306
  %v337 = vadd.f32 %v329, %v308
  %v338 = vadd.f32 %v317, %v267
  %v339 = vadd.f32 %v321, %v269
  %v340 = vadd.f32 %v325, %v310
  %vm341 = vcmp.lt.s32.totalorder %v26, 16
  %v342 = vsel %vm341, %v337, -1e+30
  %343 = vmax.xlane.f32.xlu0 %v342
  %v344 = vpop.xlane.xlu0 %343
  %v345 = vsub.f32 %v342, %v344
  %v346 = vmul.f32 %v345, 1.442695
  %v347 = vpow.pop %v346
  %348 = vadd.xlane.f32.xlu0 %v347
  %v349 = vpop.xlane.xlu0 %348
  %v350 = vlog2.pop %v349
  %v351 = vmul.f32 %v350, 0.6931472
  %v352 = vadd.f32 %v344, %v351
  %353 = vset.pattern.permute.xlu0 21
  %354 = vperm.xlu0 %353, %v33
  %v355 = vpop.permute.xlu0 %354
  %vm356 = vcmp.eq.s32.totalorder %v26, %v355
  %v357 = vsel %vm356, 1, 0
  %v358 = vcvt.s32.f32 %v357
  %v359 = vmul.f32 %v337, %v358
  %360 = vadd.xlane.f32.xlu0 %v359
  %v361 = vpop.xlane.xlu0 %360
  %v362 = vsub.f32 %v352, %v361
  %v363 = vmul.f32 %v23, %v362
  %v364 = vmul.f32 %v23, %v23
  %vm365 = vcmask 31744
  %v366 = vsel %vm365, %v364, 0.0
  %367 = vadd.xlane.f32.xlu0 %v366
  %v368 = vpop.xlane.xlu0 %367
  %v369 = vadd.f32 %v368, 1e-12
  %v370 = vrsqrt.pop %v369
  %v371 = vmul.f32 %v23, %v370
  %v372 = vmul.f32 %v371, %v371
  %374 = vrot.lane.b32.xlu0 %v372, 127
  %v375 = vpop.permute.xlu0 %374
  %v377 = vadd.f32 %v372, %v375
  %v378 = vmul.f32 %v377, 2.0
  %v379 = vsub.f32 1.0, %v378
  %381 = vrot.lane.b32.xlu0 %v371, 127
  %v382 = vpop.permute.xlu0 %381
  %v384 = vmul.f32 %v371, %v382
  %385 = vrot.lane.b32.xlu0 %v371, 125
  %v386 = vpop.permute.xlu0 %385
  %v388 = vmul.f32 %v371, %v386
  %390 = vrot.lane.b32.xlu0 %v388, 1
  %v391 = vpop.permute.xlu0 %390
  %v393 = vsub.f32 %v384, %v391
  %v394 = vmul.f32 %v393, 2.0
  %395 = vrot.lane.b32.xlu0 %v371, 126
  %v396 = vpop.permute.xlu0 %395
  %v398 = vmul.f32 %v371, %v396
  %400 = vrot.lane.b32.xlu0 %v398, 1
  %v401 = vpop.permute.xlu0 %400
  %v403 = vadd.f32 %v398, %v401
  %v404 = vmul.f32 %v403, 2.0
  %v405 = vadd.f32 %v384, %v391
  %v406 = vmul.f32 %v405, 2.0
  %407 = vrot.lane.b32.xlu0 %v372, 126
  %v408 = vpop.permute.xlu0 %407
  %v410 = vadd.f32 %v372, %v408
  %v411 = vmul.f32 %v410, 2.0
  %v412 = vsub.f32 1.0, %v411
  %414 = vrot.lane.b32.xlu0 %v384, 2
  %v415 = vpop.permute.xlu0 %414
  %v417 = vsub.f32 %v384, %v415
  %v418 = vmul.f32 %v417, 2.0
  %v419 = vsub.f32 %v398, %v401
  %v420 = vmul.f32 %v419, 2.0
  %v421 = vadd.f32 %v384, %v415
  %v422 = vmul.f32 %v421, 2.0
  %v423 = vmul.f32 %v420, %v420
  %v424 = vsub.f32 1.0, %v423
  %v425 = vmax.f32 %v424, 0.0
  %v426 = vrsqrt.pop %v425
  %v427 = vmul.f32 %v425, %v426
  %vm428 = vcmp.eq.f32.partialorder %v425, inf
  %v429 = vsel %vm428, %v425, %v427
  %vm430 = vcmp.eq.f32.partialorder %v425, 0.0
  %v431 = vand.u32 %v425, 2147483648
  %v432 = vsel %vm430, %v431, %v429
  %v433 = vmul.f32 %v422, %v422
  %v434 = vmul.f32 %v379, %v379
  %436 = vrot.lane.b32.xlu0 %v434, 1
  %v437 = vpop.permute.xlu0 %436
  %v439 = vadd.f32 %v433, %v437
  %v440 = vadd.f32 %v439, 1e-12
  %v441 = vrsqrt.pop %v440
  %443 = vrot.lane.b32.xlu0 %v441, 127
  %v444 = vpop.permute.xlu0 %443
  %v446 = vmul.f32 %v379, %v444
  %v447 = vmul.f32 %v406, %v406
  %449 = vrot.lane.b32.xlu0 %v447, 1
  %v450 = vpop.permute.xlu0 %449
  %v452 = vadd.f32 %v434, %v450
  %v453 = vadd.f32 %v452, 1e-12
  %v454 = vrsqrt.pop %v453
  %v455 = vmul.f32 %v379, %v454
  %v456 = vmul.f32 %v32, %v21
  %v457 = vmul.f32 %v456, %v21
  %458 = vadd.xlane.f32.xlu0 %v457
  %v459 = vpop.xlane.xlu0 %458
  %v460 = vrsqrt.pop %v459
  %v461 = vmul.f32 %v459, %v460
  %vm462 = vcmp.eq.f32.partialorder %v459, inf
  %v463 = vsel %vm462, %v459, %v461
  %vm464 = vcmp.eq.f32.partialorder %v459, 0.0
  %v465 = vand.u32 %v459, 2147483648
  %v466 = vsel %vm464, %v465, %v463
  %v467 = vadd.f32 %v466, 1.0
  %v468 = vrcp.pop %v467
  %v469 = vadd.f32 %v432, %v446
  %471 = vrot.lane.b32.xlu0 %v455, 127
  %v472 = vpop.permute.xlu0 %471
  %v474 = vadd.f32 %v469, %v472
  %v475 = vadd.f32 %v474, %v468
  %v476 = vmul.f32 %v475, 0.25
  %v477 = vsub.f32 %v21, %v24
  %v478 = vmul.f32 %v23, 0.5
  %v479 = vmul.f32 %v29, %v477
  %v480 = vmul.f32 %v479, %v477
  %481 = vadd.xlane.f32.xlu0 %v480
  %v482 = vpop.xlane.xlu0 %481
  %v483 = vmul.f32 %v478, %v482
  %485 = vrot.lane.b32.xlu0 %v483, 110
  %v486 = vpop.permute.xlu0 %485
  %v488 = vmul.f32 %v476, %v486
  %490 = vset.pattern.permute.xlu0 2
  %491 = vperm.xlu0 %490, %v379
  %v492 = vpop.permute.xlu0 %491
  %v494 = vmul.f32 %v492, %v334
  %496 = vset.pattern.permute.xlu0 1
  %497 = vperm.xlu0 %496, %v394
  %v498 = vpop.permute.xlu0 %497
  %v500 = vmul.f32 %v498, %v335
  %v501 = vadd.f32 %v494, %v500
  %503 = vset.pattern.permute.xlu0 1
  %504 = vperm.xlu0 %503, %v404
  %v505 = vpop.permute.xlu0 %504
  %v507 = vmul.f32 %v505, %v336
  %v508 = vadd.f32 %v501, %v507
  %510 = vset.pattern.permute.xlu0 4
  %511 = vperm.xlu0 %510, %v23
  %v512 = vpop.permute.xlu0 %511
  %v514 = vadd.f32 %v508, %v512
  %516 = vset.pattern.permute.xlu0 1
  %517 = vperm.xlu0 %516, %v406
  %v518 = vpop.permute.xlu0 %517
  %v520 = vmul.f32 %v518, %v334
  %522 = vset.pattern.permute.xlu0 1
  %523 = vperm.xlu0 %522, %v412
  %v524 = vpop.permute.xlu0 %523
  %v526 = vmul.f32 %v524, %v335
  %v527 = vadd.f32 %v520, %v526
  %529 = vset.pattern.permute.xlu0 2
  %530 = vperm.xlu0 %529, %v418
  %v531 = vpop.permute.xlu0 %530
  %v533 = vmul.f32 %v531, %v336
  %v534 = vadd.f32 %v527, %v533
  %535 = vset.pattern.permute.xlu0 5
  %536 = vperm.xlu0 %535, %v23
  %v537 = vpop.permute.xlu0 %536
  %v539 = vadd.f32 %v534, %v537
  %541 = vset.pattern.permute.xlu0 1
  %542 = vperm.xlu0 %541, %v420
  %v543 = vpop.permute.xlu0 %542
  %v545 = vmul.f32 %v543, %v334
  %547 = vset.pattern.permute.xlu0 2
  %548 = vperm.xlu0 %547, %v422
  %v549 = vpop.permute.xlu0 %548
  %v551 = vmul.f32 %v549, %v335
  %v552 = vadd.f32 %v545, %v551
  %553 = vset.pattern.permute.xlu0 1
  %554 = vperm.xlu0 %553, %v379
  %v555 = vpop.permute.xlu0 %554
  %v557 = vmul.f32 %v555, %v336
  %v558 = vadd.f32 %v552, %v557
  %559 = vset.pattern.permute.xlu0 6
  %560 = vperm.xlu0 %559, %v23
  %v561 = vpop.permute.xlu0 %560
  %v563 = vadd.f32 %v558, %v561
  %564 = vset.pattern.permute.xlu0 7
  %565 = vperm.xlu0 %564, %v23
  %v566 = vpop.permute.xlu0 %565
  %v568 = vmul.f32 %v566, %v338
  %569 = vset.pattern.permute.xlu0 8
  %570 = vperm.xlu0 %569, %v23
  %v571 = vpop.permute.xlu0 %570
  %v573 = vmul.f32 %v571, %v339
  %v574 = vadd.f32 %v568, %v573
  %575 = vset.pattern.permute.xlu0 9
  %576 = vperm.xlu0 %575, %v23
  %v577 = vpop.permute.xlu0 %576
  %v579 = vmul.f32 %v577, %v340
  %v580 = vadd.f32 %v574, %v579
  %581 = vset.pattern.permute.xlu0 10
  %582 = vperm.xlu0 %581, %v23
  %v583 = vpop.permute.xlu0 %582
  %v585 = vadd.f32 %v580, %v583
  %586 = vset.pattern.permute.xlu0 11
  %587 = vperm.xlu0 %586, %v23
  %v588 = vpop.permute.xlu0 %587
  %v590 = vmul.f32 %v588, %v338
  %591 = vset.pattern.permute.xlu0 12
  %592 = vperm.xlu0 %591, %v23
  %v593 = vpop.permute.xlu0 %592
  %v595 = vmul.f32 %v593, %v339
  %v596 = vadd.f32 %v590, %v595
  %597 = vset.pattern.permute.xlu0 13
  %598 = vperm.xlu0 %597, %v23
  %v599 = vpop.permute.xlu0 %598
  %v601 = vmul.f32 %v599, %v340
  %v602 = vadd.f32 %v596, %v601
  %603 = vset.pattern.permute.xlu0 14
  %604 = vperm.xlu0 %603, %v23
  %v605 = vpop.permute.xlu0 %604
  %v607 = vadd.f32 %v602, %v605
  %608 = vset.pattern.permute.xlu0 15
  %609 = vperm.xlu0 %608, %v23
  %v610 = vpop.permute.xlu0 %609
  %v612 = vmul.f32 %v610, %v338
  %613 = vset.pattern.permute.xlu0 16
  %614 = vperm.xlu0 %613, %v23
  %v615 = vpop.permute.xlu0 %614
  %v617 = vmul.f32 %v615, %v339
  %v618 = vadd.f32 %v612, %v617
  %619 = vset.pattern.permute.xlu0 17
  %620 = vperm.xlu0 %619, %v23
  %v621 = vpop.permute.xlu0 %620
  %v623 = vmul.f32 %v621, %v340
  %v624 = vadd.f32 %v618, %v623
  %625 = vset.pattern.permute.xlu0 18
  %626 = vperm.xlu0 %625, %v23
  %v627 = vpop.permute.xlu0 %626
  %v629 = vadd.f32 %v624, %v627
  %v630 = vsub.f32 %v585, %v514
  %v631 = vsub.f32 %v607, %v539
  %v632 = vsub.f32 %v629, %v563
  %v633 = vmul.f32 %v630, %v630
  %v634 = vmul.f32 %v631, %v631
  %v635 = vadd.f32 %v633, %v634
  %v636 = vmul.f32 %v632, %v632
  %v637 = vadd.f32 %v635, %v636
  %v638 = vrsqrt.pop %v637
  %v639 = vmul.f32 %v637, %v638
  %vm640 = vcmp.eq.f32.partialorder %v637, inf
  %v641 = vsel %vm640, %v637, %v639
  %vm642 = vcmp.eq.f32.partialorder %v637, 0.0
  %v643 = vand.u32 %v637, 2147483648
  %v644 = vsel %vm642, %v643, %v641
  %vm645 = vcmp.lt.s32.totalorder %v26, 68
  %v646 = vsel %vm645, 1, 0
  %v647 = vcvt.s32.f32 %v646
  %v648 = vmul.f32 %v647, %v644
  %649 = vadd.xlane.f32.xlu0 %v648
  %v650 = vpop.xlane.xlu0 %649
  %v651 = vmul.f32 %v650, 0.007352941
  %v652 = vmul.f32 %v29, %v21
  %v653 = vmul.f32 %v652, %v21
  %654 = vadd.xlane.f32.xlu0 %v653
  %v655 = vpop.xlane.xlu0 %654
  %v656 = vmul.f32 %v23, %v651
  %v657 = vmul.f32 %v655, 0.125
  %v658 = vmul.f32 %v459, 0.125
  %660 = vrot.lane.b32.xlu0 %v363, 109
  %v661 = vpop.permute.xlu0 %660
  %664 = vrot.lane.b32.xlu0 %v488, 1
  %v665 = vpop.permute.xlu0 %664
  %668 = vrot.lane.b32.xlu0 %v656, 111
  %v669 = vpop.permute.xlu0 %668
  %671 = vrot.lane.b32.xlu0 %v23, 113
  %v672 = vpop.permute.xlu0 %671
  %vm674 = vcmask 7168
  %v675 = vsel %vm674, %v661, %v486
  %vm676 = vcmask 15360
  %v677 = vsel %vm676, %v675, %v665
  %vm678 = vcmask 23552
  %v679 = vsel %vm678, %v677, %v669
  %v680 = vsel %vm365, %v679, %v672
  %vm681 = vcmask 39936
  %v682 = vsel %vm681, %v680, %v672
  %vm683 = vcmask 48128
  %v684 = vsel %vm683, %v682, %v657
  %vm685 = vcmask 56320
  %v686 = vsel %vm685, %v684, %v658
  %vm687 = vcmask 64512
  %v688 = vsel %vm687, %v686, 0.0
  %v689 = vrot.slane %v688, 4
  %v690 = vadd.f32 %v688, %v689
  %v691 = vrot.slane %v690, 2
  %v692 = vadd.f32 %v690, %v691
  %v693 = vrot.slane %v692, 1
  %v694 = vadd.f32 %v692, %v693
  %vm695 = vcmask 57344
  %696 = vst.msk [vmem:[%s5] sm:$0x1] %vm695, %v694
  // Predicated region
  $region22: #{mixed_loss_fr_batch.1} parent=0 // pred_check
    _
  $region23: #{mixed_loss_fr_batch.1} parent=0 // pred_check_branch
    %698 = sbr.rel (0) target = $region25
  $region24: #{mixed_loss_fr_batch.1} parent=0 // pred_region
    _
  $region25: #{mixed_loss_fr_batch.1} parent=0 // pred_fallthru
    _
  // Predicated region
  $region26: #{mixed_loss_fr_batch.1} parent=0 // pred_check
    _
  $region27: #{mixed_loss_fr_batch.1} parent=0 // pred_check_branch
    %700 = sbr.rel (0) target = $region29
  $region28: #{mixed_loss_fr_batch.1} parent=0 // pred_region
    _
  $region29: #{mixed_loss_fr_batch.1} parent=0 // pred_fallthru
    _

</llo_original>
